<compile_context>
chip_gen: v5e
topology: v5e:2x2
jax: 0.10.0
libtpu: 0.0.40
codegen_flags: <defaults>
</compile_context>

<pallas_src>
import jax
import jax.numpy as jnp
from jax.experimental import pallas as pl
from jax.experimental.pallas import tpu as pltpu

N_NODES = 16        # number of graph nodes
IN_CH = 8           # input_channel
OUT_CH = 32         # GATConv output channels
NEG_SLOPE = 0.2     # PyG GATConv default negative_slope (python float)
NEG_INF = -1e30     # python float -> lowered as a literal


# --------------------------------------------------------------------------- #
# Kernel: one grid step == one graph of the batch.
# --------------------------------------------------------------------------- #
def gat_encoder_kernel(x_ref, edge_ref, w_ref, bias_ref, out_ref):
    n = x_ref.shape[0]          # nodes
    num_e = edge_ref.shape[1]   # edges

    # Fused linear transform (MXU): cols [0:OUT) = x@W,
    # col OUT = x@(W@att_src^T), col OUT+1 = x@(W@att_dst^T).
    h_ext = jnp.dot(x_ref[...], w_ref[...], preferred_element_type=jnp.float32)
    h = h_ext[:, :OUT_CH]                        # [n, OUT]
    a_src = h_ext[:, OUT_CH:OUT_CH + 1]          # [n, 1]  (per-source score)
    a_dst = h_ext[:, OUT_CH + 1:OUT_CH + 2]      # [n, 1]  (per-dest score)

    # Adjacency mask built in-kernel from the edge list (no host scatter).
    # mask[i, j] == True  iff  there is a message j -> i (or i == j, self loop).
    edges = edge_ref[...]                                        # [2, E] int32
    node_ids = jax.lax.broadcasted_iota(jnp.int32, (n, num_e), 0)
    src_oh = (node_ids == edges[0:1, :]).astype(jnp.float32)     # [n, E]
    dst_oh = (node_ids == edges[1:2, :]).astype(jnp.float32)     # [n, E]
    counts = jax.lax.dot_general(                                # [n, n] = dst_oh @ src_oh^T
        dst_oh, src_oh, (((1,), (1,)), ((), ())),
        preferred_element_type=jnp.float32)
    row_ids = jax.lax.broadcasted_iota(jnp.int32, (n, n), 0)
    col_ids = jax.lax.broadcasted_iota(jnp.int32, (n, n), 1)
    mask = (counts > 0.5) | (row_ids == col_ids)                 # + self loops

    # e[i, j] = leaky_relu(a_dst[i] + a_src[j]); the a_src row-broadcast is an
    # outer product (ones @ a_src^T) on the MXU — no in-kernel transpose.
    ones_col = jnp.ones((n, 1), jnp.float32)
    a_src_bcast = jax.lax.dot_general(                           # [n, n] = a_src[j]
        ones_col, a_src, (((1,), (1,)), ((), ())),
        preferred_element_type=jnp.float32)
    e = a_dst + a_src_bcast                                      # [n, n]
    e = jnp.where(e > 0, e, NEG_SLOPE * e)                       # leaky relu
    e = jnp.where(mask, e, NEG_INF)

    # Row softmax over incoming neighbours j.  Self loops guarantee a finite
    # per-row max, and exp(NEG_INF - finite) underflows to exactly 0.
    e_max = jnp.max(e, axis=-1, keepdims=True)
    p = jnp.exp(e - e_max)
    denom = jnp.sum(p, axis=-1, keepdims=True)
    alpha = p * pl.reciprocal(denom, approx=True)                # EUP vrcp

    # Aggregate, bias, ReLU.
    out = jnp.dot(alpha, h, preferred_element_type=jnp.float32) + bias_ref[...]
    out_ref[...] = jnp.maximum(out, 0.0)


# --------------------------------------------------------------------------- #
# Wrappers
# --------------------------------------------------------------------------- #
def fold_params(params):
    """Parameter-only prep, hoisted out of the per-call path (done once)."""
    w = params["W"]                                              # [IN, OUT]
    w_ext = jnp.concatenate(
        [w, w @ params["att_src"].T, w @ params["att_dst"].T], axis=1)  # [IN, OUT+2]
    return {"W_ext": w_ext, "bias": params["bias"]}


def gat_batched(xb, edge_b, folded):
    """B graphs per pallas_call.  xb: [B, N, IN_CH] f32, edge_b: [B, 2, E] i32."""
    batch, n, in_ch = xb.shape
    num_e = edge_b.shape[-1]
    w_ext, bias = folded["W_ext"], folded["bias"]

    return pl.pallas_call(
        gat_encoder_kernel,
        out_shape=jax.ShapeDtypeStruct((batch, n, OUT_CH), jnp.float32),
        grid=(batch,),
        in_specs=[
            pl.BlockSpec((None, n, in_ch), lambda b: (b, 0, 0)),     # x, per graph
            pl.BlockSpec((None, 2, num_e), lambda b: (b, 0, 0)),     # edges, per graph
            pl.BlockSpec((in_ch, OUT_CH + 2), lambda b: (0, 0)),     # W_ext (shared)
            pl.BlockSpec((1, OUT_CH), lambda b: (0, 0)),             # bias (shared)
        ],
        out_specs=pl.BlockSpec((None, n, OUT_CH), lambda b: (b, 0, 0)),
        compiler_params=pltpu.CompilerParams(
            dimension_semantics=("parallel",)),   # batch axis shards across TCs on v7x
    )(xb, edge_b, w_ext, bias)


def encoder_forward(x, edge_index, folded):
    """Single-graph Encoder.forward: returns (relu(GATConv(x, ei)), ei)."""
    out = gat_batched(x[None], edge_index[None], folded)
    return out[0], edge_index


# --------------------------------------------------------------------------- #
# Pure-JAX reference (PyG GATConv segment-softmax semantics, heads=1)
# --------------------------------------------------------------------------- #
def gat_reference(x, edge_index, params):
    n = x.shape[0]
    h = x @ params["W"]
    src = jnp.concatenate([edge_index[0], jnp.arange(n)])   # + self loops
    dst = jnp.concatenate([edge_index[1], jnp.arange(n)])
    a_src = jnp.sum(h * params["att_src"], axis=-1)
    a_dst = jnp.sum(h * params["att_dst"], axis=-1)
    e = a_src[src] + a_dst[dst]
    e = jnp.where(e > 0, e, NEG_SLOPE * e)
    e_max = jax.ops.segment_max(e, dst, num_segments=n)[dst]
    p = jnp.exp(e - e_max)
    denom = jax.ops.segment_sum(p, dst, num_segments=n)[dst]
    alpha = p / denom
    out = jax.ops.segment_sum(alpha[:, None] * h[src], dst, num_segments=n)
    return jnp.maximum(out + params["bias"], 0.0)


def init_params(key):
    k_w, k_as, k_ad = jax.random.split(key, 3)
    glorot_w = (6.0 / (IN_CH + OUT_CH)) ** 0.5
    glorot_a = (6.0 / (1 + OUT_CH)) ** 0.5
    return {
        "W": jax.random.uniform(k_w, (IN_CH, OUT_CH), jnp.float32,
                                -glorot_w, glorot_w),
        "att_src": jax.random.uniform(k_as, (1, OUT_CH), jnp.float32,
                                      -glorot_a, glorot_a),
        "att_dst": jax.random.uniform(k_ad, (1, OUT_CH), jnp.float32,
                                      -glorot_a, glorot_a),
        "bias": jnp.zeros((1, OUT_CH), jnp.float32),
    }


if __name__ == "__main__":
    key = jax.random.PRNGKey(0)
    k_param, k_x, k_xb = jax.random.split(key, 3)

    params = init_params(k_param)
    folded = fold_params(params)     # parameter prep hoisted out of the call path

    # Node features and a deterministic ring graph (stand-in for data.x /
    # data.train_pos_edge_index).  No duplicate edges (see semantics caveat).
    x = jax.random.normal(k_x, (N_NODES, IN_CH), jnp.float32)
    ring = jnp.arange(N_NODES)
    src = jnp.concatenate([ring, ring])
    dst = jnp.concatenate([(ring + 1) % N_NODES, (ring - 1) % N_NODES])
    edge_index = jnp.stack([src, dst]).astype(jnp.int32)        # [2, 2N]

    # --- single graph (module semantics) ---
    out, ei_out = encoder_forward(x, edge_index, folded)
    out = jax.block_until_ready(out)
    ref = gat_reference(x, edge_index, params)
    assert out.shape == (N_NODES, OUT_CH)
    assert ei_out.shape == edge_index.shape
    # tolerance accounts for the EUP approximate reciprocal in the softmax
    assert jnp.allclose(out, ref, atol=3e-3, rtol=3e-3), "mismatch vs reference"

    # --- batched: B graphs in one pallas_call (parallel grid axis) ---
    B = 4
    xb = jax.random.normal(k_xb, (B, N_NODES, IN_CH), jnp.float32)
    edge_b = jnp.tile(edge_index[None], (B, 1, 1)).astype(jnp.int32)
    outb = jax.block_until_ready(gat_batched(xb, edge_b, folded))
    assert outb.shape == (B, N_NODES, OUT_CH)
    for b in range(B):
        refb = gat_reference(xb[b], edge_index, params)
        assert jnp.allclose(outb[b], refb, atol=3e-3, rtol=3e-3), f"batch {b} mismatch"

    print("KERNEL_OK")
</pallas_src>

<mosaic_0001>
module attributes {stable_mosaic.version = 11 : i64} {
  func.func @gat_encoder_kernel(%arg0: i32, %arg1: memref<1x16x8xf32, #tpu.memory_space<vmem>>, %arg2: memref<1x2x32xi32, #tpu.memory_space<vmem>>, %arg3: memref<8x34xf32, #tpu.memory_space<vmem>>, %arg4: memref<1x32xf32, #tpu.memory_space<vmem>>, %arg5: memref<1x16x32xf32, #tpu.memory_space<vmem>>) attributes {dimension_semantics = [#tpu.dimension_semantics<parallel>], iteration_bounds = array<i64: 1>, scalar_prefetch = 0 : i64, scratch_operands = 0 : i64, tpu.core_type = #tpu.core_type<tc>, window_params = [{transform_indices = @transform_0, window_bounds = array<i64: 1, 16, 8>}, {transform_indices = @transform_1, window_bounds = array<i64: 1, 2, 32>}, {pipeline_mode = #tpu.pipeline_mode<synchronous>, transform_indices = @transform_2, window_bounds = array<i64: 8, 34>}, {pipeline_mode = #tpu.pipeline_mode<synchronous>, transform_indices = @transform_3, window_bounds = array<i64: 1, 32>}, {transform_indices = @transform_4, window_bounds = array<i64: 1, 16, 32>}]} {
    %c0 = arith.constant 0 : index
    %c0_0 = arith.constant 0 : index
    %c0_1 = arith.constant 0 : index
    %0 = vector.load %arg1[%c0, %c0_0, %c0_1] : memref<1x16x8xf32, #tpu.memory_space<vmem>>, vector<1x16x8xf32>
    %1 = vector.shape_cast %0 : vector<1x16x8xf32> to vector<16x8xf32>
    %c0_2 = arith.constant 0 : index
    %c0_3 = arith.constant 0 : index
    %2 = vector.load %arg3[%c0_2, %c0_3] : memref<8x34xf32, #tpu.memory_space<vmem>>, vector<8x34xf32>
    %cst = arith.constant dense<0.000000e+00> : vector<16x34xf32>
    %3 = tpu.matmul %1, %2, %cst {dimension_numbers = #tpu.dot_dimension_numbers<[1], [0], [0], [1], [0, 0, 1, 1], [], []>} : vector<16x8xf32>, vector<8x34xf32>, vector<16x34xf32> -> vector<16x34xf32>
    %4 = vector.extract_strided_slice %3 {offsets = [0, 0], sizes = [16, 32], strides = [1, 1]} : vector<16x34xf32> to vector<16x32xf32>
    %5 = vector.extract_strided_slice %3 {offsets = [0, 32], sizes = [16, 1], strides = [1, 1]} : vector<16x34xf32> to vector<16x1xf32>
    %6 = vector.extract_strided_slice %3 {offsets = [0, 33], sizes = [16, 1], strides = [1, 1]} : vector<16x34xf32> to vector<16x1xf32>
    %c0_4 = arith.constant 0 : index
    %c0_5 = arith.constant 0 : index
    %c0_6 = arith.constant 0 : index
    %7 = vector.load %arg2[%c0_4, %c0_5, %c0_6] : memref<1x2x32xi32, #tpu.memory_space<vmem>>, vector<1x2x32xi32>
    %8 = vector.shape_cast %7 : vector<1x2x32xi32> to vector<2x32xi32>
    %9 = tpu.iota {dimensions = array<i32: 0>} : vector<16x32xi32>
    %10 = vector.extract_strided_slice %8 {offsets = [0, 0], sizes = [1, 32], strides = [1, 1]} : vector<2x32xi32> to vector<1x32xi32>
    %11 = vector.broadcast %10 : vector<1x32xi32> to vector<16x32xi32>
    %12 = arith.cmpi eq, %9, %11 : vector<16x32xi32>
    %13 = arith.extui %12 : vector<16x32xi1> to vector<16x32xi32>
    %14 = arith.sitofp %13 : vector<16x32xi32> to vector<16x32xf32>
    %15 = vector.extract_strided_slice %8 {offsets = [1, 0], sizes = [1, 32], strides = [1, 1]} : vector<2x32xi32> to vector<1x32xi32>
    %16 = vector.broadcast %15 : vector<1x32xi32> to vector<16x32xi32>
    %17 = arith.cmpi eq, %9, %16 : vector<16x32xi32>
    %18 = arith.extui %17 : vector<16x32xi1> to vector<16x32xi32>
    %19 = arith.sitofp %18 : vector<16x32xi32> to vector<16x32xf32>
    %cst_7 = arith.constant dense<0.000000e+00> : vector<16x16xf32>
    %20 = tpu.matmul %19, %14, %cst_7 {dimension_numbers = #tpu.dot_dimension_numbers<[1], [1], [0], [0], [0, 0, 1, 0], [], []>} : vector<16x32xf32>, vector<16x32xf32>, vector<16x16xf32> -> vector<16x16xf32>
    %21 = tpu.iota {dimensions = array<i32: 0>} : vector<16x16xi32>
    %22 = tpu.iota {dimensions = array<i32: 1>} : vector<16x16xi32>
    %cst_8 = arith.constant 5.000000e-01 : f32
    %23 = vector.broadcast %cst_8 : f32 to vector<16x16xf32>
    %24 = arith.cmpf ogt, %20, %23 : vector<16x16xf32>
    %25 = arith.cmpi eq, %21, %22 : vector<16x16xi32>
    %26 = arith.ori %24, %25 : vector<16x16xi1>
    %cst_9 = arith.constant 1.000000e+00 : f32
    %27 = vector.broadcast %cst_9 : f32 to vector<16x1xf32>
    %cst_10 = arith.constant dense<0.000000e+00> : vector<16x16xf32>
    %28 = tpu.matmul %27, %5, %cst_10 {dimension_numbers = #tpu.dot_dimension_numbers<[1], [1], [0], [0], [0, 0, 1, 0], [], []>} : vector<16x1xf32>, vector<16x1xf32>, vector<16x16xf32> -> vector<16x16xf32>
    %29 = vector.broadcast %6 : vector<16x1xf32> to vector<16x16xf32>
    %30 = arith.addf %29, %28 : vector<16x16xf32>
    %cst_11 = arith.constant 0.000000e+00 : f32
    %31 = vector.broadcast %cst_11 : f32 to vector<16x16xf32>
    %32 = arith.cmpf ogt, %30, %31 : vector<16x16xf32>
    %cst_12 = arith.constant 2.000000e-01 : f32
    %33 = vector.broadcast %cst_12 : f32 to vector<16x16xf32>
    %34 = arith.mulf %33, %30 : vector<16x16xf32>
    %35 = arith.select %32, %30, %34 : vector<16x16xi1>, vector<16x16xf32>
    %cst_13 = arith.constant -1.000000e+30 : f32
    %36 = vector.broadcast %cst_13 : f32 to vector<16x16xf32>
    %37 = arith.select %26, %35, %36 : vector<16x16xi1>, vector<16x16xf32>
    %cst_14 = arith.constant dense<0xFF800000> : vector<16xf32>
    %38 = vector.multi_reduction <maximumf>, %37, %cst_14 [1] : vector<16x16xf32> to vector<16xf32>
    %39 = vector.shape_cast %38 : vector<16xf32> to vector<16x1xf32>
    %40 = vector.broadcast %39 : vector<16x1xf32> to vector<16x16xf32>
    %41 = arith.subf %37, %40 : vector<16x16xf32>
    %42 = math.exp %41 : vector<16x16xf32>
    %cst_15 = arith.constant dense<0.000000e+00> : vector<16xf32>
    %43 = vector.multi_reduction <add>, %42, %cst_15 [1] : vector<16x16xf32> to vector<16xf32>
    %44 = vector.shape_cast %43 : vector<16xf32> to vector<16x1xf32>
    %45 = tpu.reciprocal %44 {approx = true} : vector<16x1xf32> -> vector<16x1xf32>
    %46 = vector.broadcast %45 : vector<16x1xf32> to vector<16x16xf32>
    %47 = arith.mulf %42, %46 : vector<16x16xf32>
    %cst_16 = arith.constant dense<0.000000e+00> : vector<16x32xf32>
    %48 = tpu.matmul %47, %4, %cst_16 {dimension_numbers = #tpu.dot_dimension_numbers<[1], [0], [0], [1], [0, 0, 1, 1], [], []>} : vector<16x16xf32>, vector<16x32xf32>, vector<16x32xf32> -> vector<16x32xf32>
    %c0_17 = arith.constant 0 : index
    %c0_18 = arith.constant 0 : index
    %49 = vector.load %arg4[%c0_17, %c0_18] : memref<1x32xf32, #tpu.memory_space<vmem>>, vector<1x32xf32>
    %50 = vector.broadcast %49 : vector<1x32xf32> to vector<16x32xf32>
    %51 = arith.addf %48, %50 : vector<16x32xf32>
    %cst_19 = arith.constant 0.000000e+00 : f32
    %52 = vector.broadcast %cst_19 : f32 to vector<16x32xf32>
    %53 = arith.maximumf %51, %52 : vector<16x32xf32>
    %c0_20 = arith.constant 0 : index
    %c0_21 = arith.constant 0 : index
    %c0_22 = arith.constant 0 : index
    %54 = vector.load %arg5[%c0_20, %c0_21, %c0_22] : memref<1x16x32xf32, #tpu.memory_space<vmem>>, vector<1x16x32xf32>
    %55 = vector.shape_cast %54 : vector<1x16x32xf32> to vector<16x32xf32>
    %56 = vector.shape_cast %53 : vector<16x32xf32> to vector<1x16x32xf32>
    tpu.vector_store %arg5[%c0_20, %c0_21, %c0_22], %56 {strides = array<i32>} : memref<1x16x32xf32, #tpu.memory_space<vmem>>, vector<1x16x32xf32>,
    return
  }
  func.func @transform_0(%arg0: i32) -> (i32, i32, i32) {
    %c0_i32 = arith.constant 0 : i32
    %c0_i32_0 = arith.constant 0 : i32
    %c0_i32_1 = arith.constant 0 : i32
    return %arg0, %c0_i32, %c0_i32_0 : i32, i32, i32
  }
  func.func @transform_1(%arg0: i32) -> (i32, i32, i32) {
    %c0_i32 = arith.constant 0 : i32
    %c0_i32_0 = arith.constant 0 : i32
    %c0_i32_1 = arith.constant 0 : i32
    return %arg0, %c0_i32, %c0_i32_0 : i32, i32, i32
  }
  func.func @transform_2(%arg0: i32) -> (i32, i32) {
    %c0_i32 = arith.constant 0 : i32
    %c0_i32_0 = arith.constant 0 : i32
    %c0_i32_1 = arith.constant 0 : i32
    return %c0_i32, %c0_i32_0 : i32, i32
  }
  func.func @transform_3(%arg0: i32) -> (i32, i32) {
    %c0_i32 = arith.constant 0 : i32
    %c0_i32_0 = arith.constant 0 : i32
    %c0_i32_1 = arith.constant 0 : i32
    return %c0_i32, %c0_i32_0 : i32, i32
  }
  func.func @transform_4(%arg0: i32) -> (i32, i32, i32) {
    %c0_i32 = arith.constant 0 : i32
    %c0_i32_0 = arith.constant 0 : i32
    %c0_i32_1 = arith.constant 0 : i32
    return %arg0, %c0_i32, %c0_i32_0 : i32, i32, i32
  }
}

</mosaic_0001>

<llo_original>
// kernel: tpu_custom_call.1
$region0: #{tpu_custom_call.1}
  #allocation0 [shape = 'u32[]', space=smem, size = 0x4, offset = 0x4, fixed_abs, tag = 'smem constant byte address 0x4 - core index']
  #allocation1 [shape = 'u32[72,128]{1,0:T(1,128)}', space=vmem, size = 0x9000, scoped, tag = 'internal scratch']
  %s0 = inlined_call_operand.vmem [shape: f32[1,16,8], index: 0, kind: input, shape index: {}]
  %s1 = inlined_call_operand.vmem [shape: s32[1,2,32], index: 1, kind: input, shape index: {}]
  %s2 = inlined_call_operand.vmem [shape: f32[8,34], index: 2, kind: input, shape index: {}]
  %s3 = inlined_call_operand.vmem [shape: f32[1,32], index: 3, kind: input, shape index: {}]
  %s4 = inlined_call_operand.hbm [shape: f32[1,16,32], index: 4, kind: output, shape index: {}]
  %s5 = sld [smem:[#allocation0]]
  $region26: #{tpu_custom_call.1} parent=0
    _
  %s7 = ssub.s32 1, %s5
  %s8 = scalar_select 0, %s7, %s5
  $region1: #{tpu_custom_call.1} parent=0
    #allocation2 [shape = 'u8[8192]{0}', space=vmem, size = 0x2000, scoped, tag = 'output window, operand 0, single buffered']
    #allocation3 [shape = 's32[1]{0}', space=sflag, size = 0x4, scoped, tag = 'scoped memory for tpu_custom_call.1']
    %9 = vsyncpa [#allocation3], 0
    // Predicated region
    $region2: #{tpu_custom_call.1} parent=1 // pred_check
      _
    $region3: #{tpu_custom_call.1} parent=1 // pred_check_branch
      %11 = sbr.rel (0) target = $region5
    $region4: #{tpu_custom_call.1} parent=1 // pred_region
      _
    $region5: #{tpu_custom_call.1} parent=1 // pred_fallthru
      _
    // Predicated region
    $region6: #{tpu_custom_call.1} parent=1 // pred_check
      _
    $region7: #{tpu_custom_call.1} parent=1 // pred_check_branch
      %13 = sbr.rel (0) target = $region9
    $region8: #{tpu_custom_call.1} parent=1 // pred_region
      _
    $region9: #{tpu_custom_call.1} parent=1 // pred_fallthru
      _
    // Predicated region
    $region10: #{tpu_custom_call.1} parent=1 // pred_check
      _
    $region11: #{tpu_custom_call.1} parent=1 // pred_check_branch
      %15 = sbr.rel (0) target = $region13
    $region12: #{tpu_custom_call.1} parent=1 // pred_region
      _
    $region13: #{tpu_custom_call.1} parent=1 // pred_fallthru
      _
    // Predicated region
    $region14: #{tpu_custom_call.1} parent=1 // pred_check
      _
    $region15: #{tpu_custom_call.1} parent=1 // pred_check_branch
      %17 = sbr.rel (0) target = $region17
    $region16: #{tpu_custom_call.1} parent=1 // pred_region
      _
    $region17: #{tpu_custom_call.1} parent=1 // pred_fallthru
      _
    %v18 = vld [vmem:[%s0] sm:$0xff]
    %v19 = vld [vmem:[%s0 + $0x8] sm:$0xff]
    %v20 = vld [vmem:[%s2] sm:$0xff]
    %vm21 = vcmask 64512
    %v23 = vsel %vm21, %v18, 0
    %v26 = vsel %vm21, %v19, 0
    %28 = vmatpush.msra.mxu0 0.0
    %29 = vmatpush.msra.mxu0 0.0
    %30 = vmatpush.msra.mxu0 0.0
    %31 = vmatpush.msra.mxu0 0.0
    %32 = vmatpush.msra.mxu0 0.0
    %33 = vmatpush.msra.mxu0 0.0
    %34 = vmatpush.msra.mxu0 0.0
    %35 = vmatpush.msra.mxu0 0.0
    %36 = vmatpush.msra.mxu0 0.0
    %37 = vmatpush.msra.mxu0 0.0
    %38 = vmatpush.msra.mxu0 0.0
    %39 = vmatpush.msra.mxu0 0.0
    %40 = vmatpush.msra.mxu0 0.0
    %41 = vmatpush.msra.mxu0 0.0
    %42 = vmatpush.msra.mxu0 0.0
    %43 = vmatpush.msra.mxu0 %v20
    %44 = vmatmul.f32.gmra.mxu0 %v23
    %v45 = vpop.f32.mrf.mxu0
    %v46 = vadd.f32 0.0, %v45
    %47 = vmatmul.f32.gmra.mxu0 %v26
    %v48 = vpop.f32.mrf.mxu0
    %v49 = vadd.f32 0.0, %v48
    %50 = vdwg.mxu0
    %v51 = vld [vmem:[%s1] sm:$0x3]
    %v52 = vlaneseq
    %v53 = vshrl.u32 %v52, 7
    %v54 = vadd.s32 %v53, 8
    %v55 = vperm.slane %v51, 0
    %vm56 = vcmp.eq.s32.totalorder %v53, %v55
    %vm57 = vcmp.eq.s32.totalorder %v54, %v55
    %v58 = vsel %vm56, 1, 0
    %v59 = vsel %vm57, 1, 0
    %v60 = vcvt.s32.f32 %v58
    %v61 = vcvt.s32.f32 %v59
    %v62 = vperm.slane %v51, 1
    %vm63 = vcmp.eq.s32.totalorder %v53, %v62
    %vm64 = vcmp.eq.s32.totalorder %v54, %v62
    %v65 = vsel %vm63, 1, 0
    %v66 = vsel %vm64, 1, 0
    %v67 = vcvt.s32.f32 %v65
    %v68 = vcvt.s32.f32 %v66
    %vm69 = vcmask 261120
    %v71 = vsel %vm69, %v67, 0
    %v74 = vsel %vm69, %v68, 0
    %v77 = vsel %vm69, %v60, 0
    %v80 = vsel %vm69, %v61, 0
    %82 = vmatpush.xpose.msra.mxu0 0.0
    %83 = vmatpush.xpose.msra.mxu0 0.0
    %84 = vmatpush.xpose.msra.mxu0 0.0
    %85 = vmatpush.xpose.msra.mxu0 0.0
    %86 = vmatpush.xpose.msra.mxu0 0.0
    %87 = vmatpush.xpose.msra.mxu0 0.0
    %88 = vmatpush.xpose.msra.mxu0 0.0
    %89 = vmatpush.xpose.msra.mxu0 0.0
    %90 = vmatpush.xpose.msra.mxu0 0.0
    %91 = vmatpush.xpose.msra.mxu0 0.0
    %92 = vmatpush.xpose.msra.mxu0 0.0
    %93 = vmatpush.xpose.msra.mxu0 0.0
    %94 = vmatpush.xpose.msra.mxu0 0.0
    %95 = vmatpush.xpose.msra.mxu0 0.0
    %96 = vmatpush.xpose.msra.mxu0 %v80
    %97 = vmatpush.xpose.msra.mxu0 %v77
    %98 = vmatmul.f32.gmra.mxu0 %v71
    %v99 = vpop.f32.mrf.mxu0
    %v100 = vadd.f32 0.0, %v99
    %101 = vmatmul.f32.gmra.mxu0 %v74
    %v102 = vpop.f32.mrf.mxu0
    %v103 = vadd.f32 0.0, %v102
    %104 = vdwg.mxu0
    %v105 = vlaneseq
    %v106 = vand.u32 %v105, 127
    %vm107 = vcmp.gt.f32.partialorder %v100, 0.5
    %vm108 = vcmp.gt.f32.partialorder %v103, 0.5
    %vm109 = vcmp.eq.s32.totalorder %v53, %v106
    %vm110 = vcmp.eq.s32.totalorder %v54, %v106
    %vm111 = vmor %vm107, %vm109
    %vm112 = vmor %vm108, %vm110
    %115 = vrot.lane.b32.xlu0 %v46, 96
    %v116 = vpop.permute.xlu0 %115
    %117 = vrot.lane.b32.xlu0 %v49, 96
    %v118 = vpop.permute.xlu0 %117
    %vm119 = vcmask 7168
    %v121 = vsel %vm119, 1.0, 0
    %v123 = vsel %vm119, %v116, 0
    %v125 = vsel %vm119, %v118, 0
    %127 = vmatpush.xpose.msra.mxu0 0.0
    %128 = vmatpush.xpose.msra.mxu0 0.0
    %129 = vmatpush.xpose.msra.mxu0 0.0
    %130 = vmatpush.xpose.msra.mxu0 0.0
    %131 = vmatpush.xpose.msra.mxu0 0.0
    %132 = vmatpush.xpose.msra.mxu0 0.0
    %133 = vmatpush.xpose.msra.mxu0 0.0
    %134 = vmatpush.xpose.msra.mxu0 0.0
    %135 = vmatpush.xpose.msra.mxu0 0.0
    %136 = vmatpush.xpose.msra.mxu0 0.0
    %137 = vmatpush.xpose.msra.mxu0 0.0
    %138 = vmatpush.xpose.msra.mxu0 0.0
    %139 = vmatpush.xpose.msra.mxu0 0.0
    %140 = vmatpush.xpose.msra.mxu0 0.0
    %141 = vmatpush.xpose.msra.mxu0 %v125
    %142 = vmatpush.xpose.msra.mxu0 %v123
    %143 = vmatmul.f32.gmra.mxu0 %v121
    %v144 = vpop.f32.mrf.mxu0
    %v145 = vadd.f32 0.0, %v144
    %146 = vmatmul.f32.gmra.mxu0 %v121
    %v147 = vpop.f32.mrf.mxu0
    %v148 = vadd.f32 0.0, %v147
    %149 = vdwg.mxu0
    %150 = vset.pattern.permute.xlu0 33
    %151 = vperm.xlu0 %150, %v46
    %v152 = vpop.permute.xlu0 %151
    %154 = vset.pattern.permute.xlu0 33
    %155 = vperm.xlu0 %154, %v49
    %v156 = vpop.permute.xlu0 %155
    %v158 = vadd.f32 %v152, %v145
    %v159 = vadd.f32 %v156, %v148
    %vm160 = vcmp.gt.f32.partialorder %v158, 0.0
    %vm161 = vcmp.gt.f32.partialorder %v159, 0.0
    %v162 = vmul.f32 %v158, 0.2
    %v163 = vmul.f32 %v159, 0.2
    %v164 = vsel %vm160, %v158, %v162
    %v165 = vsel %vm161, %v159, %v163
    %v166 = vsel %vm111, %v164, -1e+30
    %v167 = vsel %vm112, %v165, -1e+30
    %vm168 = vcmask 130048
    %v169 = vsel %vm168, %v166, -inf
    %170 = vmax.xlane.f32.xlu0 %v169
    %v171 = vpop.xlane.xlu0 %170
    %v172 = vsel %vm168, %v167, -inf
    %173 = vmax.xlane.f32.xlu0 %v172
    %v174 = vpop.xlane.xlu0 %173
    %v175 = vsub.f32 %v166, %v171
    %v176 = vsub.f32 %v167, %v174
    %v177 = vmul.f32 %v175, 1.442695
    %v178 = vpow.pop %v177
    %v179 = vmul.f32 %v176, 1.442695
    %v180 = vpow.pop %v179
    %v181 = vsel %vm168, %v178, 0.0
    %182 = vadd.xlane.f32.xlu0 %v181
    %v183 = vpop.xlane.xlu0 %182
    %v184 = vsel %vm168, %v180, 0.0
    %185 = vadd.xlane.f32.xlu0 %v184
    %v186 = vpop.xlane.xlu0 %185
    %v187 = vrcp.pop %v183
    %v188 = vrcp.pop %v186
    %v189 = vmul.f32 %v178, %v187
    %v190 = vmul.f32 %v180, %v188
    %v191 = vld [vmem:[%s3] sm:$0x1]
    %v193 = vperm.slane %v191, 0
    %v196 = vsel %vm168, %v189, 0
    %v199 = vsel %vm168, %v190, 0
    %201 = vmatpush.msra.mxu0 0.0
    %202 = vmatpush.msra.mxu0 0.0
    %203 = vmatpush.msra.mxu0 0.0
    %204 = vmatpush.msra.mxu0 0.0
    %205 = vmatpush.msra.mxu0 0.0
    %206 = vmatpush.msra.mxu0 0.0
    %207 = vmatpush.msra.mxu0 0.0
    %208 = vmatpush.msra.mxu0 0.0
    %209 = vmatpush.msra.mxu0 0.0
    %210 = vmatpush.msra.mxu0 0.0
    %211 = vmatpush.msra.mxu0 0.0
    %212 = vmatpush.msra.mxu0 0.0
    %213 = vmatpush.msra.mxu0 0.0
    %214 = vmatpush.msra.mxu0 0.0
    %215 = vmatpush.msra.mxu0 %v49
    %216 = vmatpush.msra.mxu0 %v46
    %217 = vmatmul.f32.gmra.mxu0 %v196
    %v218 = vpop.f32.mrf.mxu0
    %v219 = vadd.f32 %v193, %v218
    %220 = vmatmul.f32.gmra.mxu0 %v199
    %v221 = vpop.f32.mrf.mxu0
    %v222 = vadd.f32 %v193, %v221
    %223 = vdwg.mxu0
    %v224 = vmax.f32 %v219, 0.0
    %v225 = vmax.f32 %v222, 0.0
    %226 = vst.msk [vmem:[#allocation2] sm:$0xff] %vm69, %v224
    %227 = vst.msk [vmem:[#allocation2 + $0x8] sm:$0xff] %vm69, %v225
    // Predicated region
    $region18: #{tpu_custom_call.1} parent=1 // pred_check
      _
    $region19: #{tpu_custom_call.1} parent=1 // pred_check_branch
      %229 = sbr.rel (0) target = $region21
    $region20: #{tpu_custom_call.1} parent=1 // pred_region
      %231 = vsyncadd [#allocation3], 0
      %s232 = sshll.u32 [#allocation2], 4
      %s233 = int_to_ptr.vmem [resolvable:$true] %s232
      %s234 = sshll.u32 %s4, 4
      %s235 = int_to_ptr.hbm [resolvable:$true] %s234
      %240 = dma.vmem_to_hbm [thread:$0]  %s233, 256, %s235, [#allocation3], 128, 128, 8
    $region21: #{tpu_custom_call.1} parent=1 // pred_fallthru
      _
    // Predicated region
    $region22: #{tpu_custom_call.1} parent=1 // pred_check
      _
    $region23: #{tpu_custom_call.1} parent=1 // pred_check_branch
      %242 = sbr.rel (0) target = $region25
    $region24: #{tpu_custom_call.1} parent=1 // pred_region
      %244 = dma.done [#allocation3], 256
    $region25: #{tpu_custom_call.1} parent=1 // pred_fallthru
      _
    %245 = vsyncpa [#allocation3], 1

</llo_original>
